<compile_context>
chip_gen: v7x
topology: tpu7x:2x2x1
jax: 0.10.0
libtpu: 0.0.40
codegen_flags: <defaults>
</compile_context>

<pallas_src>
import jax
import jax.numpy as jnp
from jax.experimental import pallas as pl
from jax.experimental.pallas import tpu as pltpu


# ---------------------------------------------------------------------------
# Kernel
# ---------------------------------------------------------------------------
def _basic_nn_kernel(params_ref, x_ref, o_ref):
    # params_ref (SMEM scalar prefetch): [w00, b00, w01, w10, b10, w11, fb]
    w00 = params_ref[0]
    b00 = params_ref[1]
    w01 = params_ref[2]
    w10 = params_ref[3]
    b10 = params_ref[4]
    w11 = params_ref[5]
    final_bias = params_ref[6]

    x = x_ref[...].astype(jnp.float32)        # upcast in-register (bf16/f16 path)
    top = jnp.maximum(x * w00 + b00, 0.0) * w01
    bot = jnp.maximum(x * w10 + b10, 0.0) * w11
    o_ref[...] = jnp.maximum(top + bot + final_bias, 0.0).astype(o_ref.dtype)


# ---------------------------------------------------------------------------
# Wrapper helpers
# ---------------------------------------------------------------------------
_LANE = 128
_COL_CHOICES = (2048, 1024, 512, 256, 128)    # lane-dense slab widths
_MIN_BLOCK_BYTES = 512 * 1024                 # keep blocks >= ~512 KiB
_MAX_BLOCK_BYTES = 4 * 1024 * 1024            # <= 4 MiB: v7x-safe, ~roofline
_SMALL_BYTES = 1 << 20                        # < 1 MiB: pure-jnp fast path


def _cdiv(a, b):
    return -(-a // b)


def _round_up(x, m):
    return _cdiv(x, m) * m


def _choose_cols(n):
    """Pick a slab width. Returns (cols, aligned) where aligned means the
    flat array reshapes to (n//cols, cols) with NO copy (no pad, no slice)."""
    if n % _LANE == 0:
        for c in _COL_CHOICES:
            if n % c == 0 and n // c >= 8:     # prefer >= 8 rows (dense vregs)
                return c, True
        for c in _COL_CHOICES:
            if n % c == 0:
                return c, True
    return (2048 if n >= 8 * 2048 else _LANE), False


def _choose_tile_rows(rows, cols, sub, itemsize):
    """Adaptive block rows: ~8 grid steps, block bytes in [512 KiB, 4 MiB],
    multiple of the sublane granule, and >= 2 steps whenever splittable."""
    row_bytes = cols * itemsize
    target = _round_up(_cdiv(rows, 8), sub)                    # ~8 steps
    min_rows = _round_up(max(sub, _MIN_BLOCK_BYTES // row_bytes), sub)
    max_rows = max(sub, (_MAX_BLOCK_BYTES // row_bytes) // sub * sub)
    tr = max(min_rows, min(max_rows, target))
    if tr >= rows:
        if rows > 2 * sub:
            tr = _round_up(_cdiv(rows, 2), sub)                # 2 steps (v7x: 2 TCs)
        else:
            tr = rows                                          # tiny: full-dim block
    return tr


def _fused_jnp(x, params):
    w00, b00, w01, w10, b10, w11, fb = (params[i] for i in range(7))
    top = jnp.maximum(x * w00 + b00, 0.0) * w01
    bot = jnp.maximum(x * w10 + b10, 0.0) * w11
    return jnp.maximum(top + bot + fb, 0.0)


# ---------------------------------------------------------------------------
# Forward
# ---------------------------------------------------------------------------
def basic_nn_forward(x, params, *, force_pallas=False):
    """Applies BasicNN elementwise to `x` (any shape). Math is done in f32;
    output dtype matches the (floating) input dtype."""
    x = jnp.asarray(x)
    if x.dtype not in (jnp.float32, jnp.bfloat16, jnp.float16):
        x = x.astype(jnp.float32)
    params = jnp.asarray(params, jnp.float32)

    orig_shape = x.shape
    n = x.size
    itemsize = x.dtype.itemsize
    out_dtype = x.dtype

    if n == 0:
        return jnp.zeros(orig_shape, out_dtype)

    # Small-input fast path: XLA fuses this chain into one pass already.
    if not force_pallas and n * itemsize < _SMALL_BYTES:
        return _fused_jnp(x, params).astype(out_dtype)

    sub = 8 if itemsize == 4 else 16           # sublane granule (f32 / 16-bit)
    cols, aligned = _choose_cols(n)
    rows = _cdiv(n, cols)

    flat = x.reshape(-1)                       # free: same element count
    if aligned:
        slab = flat.reshape(rows, cols)        # free view, zero extra HBM passes
    else:
        # One unavoidable copy pass: pad the tail (< cols elements) so the
        # flat vector can be viewed as a lane-dense 2-D slab.  Padding waste
        # is < one row (<= 8 KiB), not a whole tile.
        slab = jnp.pad(flat, (0, rows * cols - n)).reshape(rows, cols)

    tile_rows = _choose_tile_rows(rows, cols, sub, itemsize)
    # Ragged last block is fine: op is elementwise, OOB reads are padded
    # (unspecified values) and OOB writes are masked; nothing crosses lanes.
    grid_rows = _cdiv(rows, tile_rows)

    out = pl.pallas_call(
        _basic_nn_kernel,
        out_shape=jax.ShapeDtypeStruct((rows, cols), out_dtype),
        grid_spec=pltpu.PrefetchScalarGridSpec(
            num_scalar_prefetch=1,             # params -> SMEM before the grid
            grid=(grid_rows,),
            in_specs=[pl.BlockSpec((tile_rows, cols), lambda i, p: (i, 0))],
            out_specs=pl.BlockSpec((tile_rows, cols), lambda i, p: (i, 0)),
        ),
        compiler_params=pltpu.CompilerParams(
            dimension_semantics=("parallel",),
            # <= 4 MiB blocks, double-buffered in+out ~= 16 MiB worst case;
            # 32 MiB is safe on v5e/v6e (128 MiB) and v7x (64 MiB physical).
            vmem_limit_bytes=32 * 1024 * 1024,
        ),
    )(params, slab)

    if aligned:
        return out.reshape(orig_shape)         # free view
    # Misaligned tail only: one output-side copy to drop the padded row.
    return out.reshape(-1)[:n].reshape(orig_shape)


def basic_nn_reference(x, params):
    return _fused_jnp(jnp.asarray(x, jnp.float32), jnp.asarray(params, jnp.float32))


# ---------------------------------------------------------------------------
# Test
# ---------------------------------------------------------------------------
if __name__ == "__main__":
    # Deterministic parameters exactly as in BasicNN.__init__.
    params = jnp.array([1.7, -0.85, -40.8, 12.6, 0.0, 2.7, 0.0], dtype=jnp.float32)

    key = jax.random.PRNGKey(0)
    k1, k2, k3 = jax.random.split(key, 3)

    # Small multi-dim input (fast path + forced small Pallas path).
    x_small = jax.random.uniform(k1, (2, 4, 16, 16), dtype=jnp.float32)
    # Large 128-aligned input: exercises the zero-copy (no pad / no slice) path.
    x_aligned = jax.random.uniform(k2, (1024, 1280), dtype=jnp.float32)
    # Large awkward-length dose vector: exercises ragged-tail handling.
    x_ragged = jax.random.uniform(k3, (1_300_003,), dtype=jnp.float32)

    out_small_fast = basic_nn_forward(x_small, params)
    out_small_pallas = basic_nn_forward(x_small, params, force_pallas=True)
    out_aligned = basic_nn_forward(x_aligned, params)
    out_ragged = basic_nn_forward(x_ragged, params)
    jax.block_until_ready((out_small_fast, out_small_pallas, out_aligned, out_ragged))

    for out, x in ((out_small_fast, x_small),
                   (out_small_pallas, x_small),
                   (out_aligned, x_aligned),
                   (out_ragged, x_ragged)):
        ref = basic_nn_reference(x, params)
        assert out.shape == x.shape
        assert out.dtype == jnp.float32
        assert jnp.allclose(out, ref, atol=1e-5, rtol=1e-5)

    print("KERNEL_OK")
</pallas_src>

<mosaic_0001>
module attributes {stable_mosaic.version = 11 : i64} {
  func.func @_basic_nn_kernel(%arg0: i32, %arg1: memref<7xf32, #tpu.memory_space<smem>>, %arg2: memref<8x256xf32, #tpu.memory_space<vmem>>, %arg3: memref<8x256xf32, #tpu.memory_space<vmem>>) attributes {dimension_semantics = [#tpu.dimension_semantics<parallel>], iteration_bounds = array<i64: 1>, scalar_prefetch = 1 : i64, scratch_operands = 0 : i64, tpu.core_type = #tpu.core_type<tc>, window_params = [{transform_indices = @transform_0, window_bounds = array<i64: 8, 256>}, {transform_indices = @transform_1, window_bounds = array<i64: 8, 256>}]} {
    %c0 = arith.constant 0 : index
    %0 = memref.load %arg1[%c0] : memref<7xf32, #tpu.memory_space<smem>>
    %c1 = arith.constant 1 : index
    %1 = memref.load %arg1[%c1] : memref<7xf32, #tpu.memory_space<smem>>
    %c2 = arith.constant 2 : index
    %2 = memref.load %arg1[%c2] : memref<7xf32, #tpu.memory_space<smem>>
    %c3 = arith.constant 3 : index
    %3 = memref.load %arg1[%c3] : memref<7xf32, #tpu.memory_space<smem>>
    %c4 = arith.constant 4 : index
    %4 = memref.load %arg1[%c4] : memref<7xf32, #tpu.memory_space<smem>>
    %c5 = arith.constant 5 : index
    %5 = memref.load %arg1[%c5] : memref<7xf32, #tpu.memory_space<smem>>
    %c6 = arith.constant 6 : index
    %6 = memref.load %arg1[%c6] : memref<7xf32, #tpu.memory_space<smem>>
    %c0_0 = arith.constant 0 : index
    %c0_1 = arith.constant 0 : index
    %7 = vector.load %arg2[%c0_0, %c0_1] : memref<8x256xf32, #tpu.memory_space<vmem>>, vector<8x256xf32>
    %8 = vector.broadcast %0 : f32 to vector<8x256xf32>
    %9 = arith.mulf %7, %8 : vector<8x256xf32>
    %10 = vector.broadcast %1 : f32 to vector<8x256xf32>
    %11 = arith.addf %9, %10 : vector<8x256xf32>
    %cst = arith.constant 0.000000e+00 : f32
    %12 = vector.broadcast %cst : f32 to vector<8x256xf32>
    %13 = arith.maximumf %11, %12 : vector<8x256xf32>
    %14 = vector.broadcast %2 : f32 to vector<8x256xf32>
    %15 = arith.mulf %13, %14 : vector<8x256xf32>
    %16 = vector.broadcast %3 : f32 to vector<8x256xf32>
    %17 = arith.mulf %7, %16 : vector<8x256xf32>
    %18 = vector.broadcast %4 : f32 to vector<8x256xf32>
    %19 = arith.addf %17, %18 : vector<8x256xf32>
    %cst_2 = arith.constant 0.000000e+00 : f32
    %20 = vector.broadcast %cst_2 : f32 to vector<8x256xf32>
    %21 = arith.maximumf %19, %20 : vector<8x256xf32>
    %22 = vector.broadcast %5 : f32 to vector<8x256xf32>
    %23 = arith.mulf %21, %22 : vector<8x256xf32>
    %24 = arith.addf %15, %23 : vector<8x256xf32>
    %25 = vector.broadcast %6 : f32 to vector<8x256xf32>
    %26 = arith.addf %24, %25 : vector<8x256xf32>
    %cst_3 = arith.constant 0.000000e+00 : f32
    %27 = vector.broadcast %cst_3 : f32 to vector<8x256xf32>
    %28 = arith.maximumf %26, %27 : vector<8x256xf32>
    %c0_4 = arith.constant 0 : index
    %c0_5 = arith.constant 0 : index
    %29 = vector.load %arg3[%c0_4, %c0_5] : memref<8x256xf32, #tpu.memory_space<vmem>>, vector<8x256xf32>
    tpu.vector_store %arg3[%c0_4, %c0_5], %28 {strides = array<i32>} : memref<8x256xf32, #tpu.memory_space<vmem>>, vector<8x256xf32>,
    return
  }
  func.func @transform_0(%arg0: i32, %arg1: memref<7xf32, #tpu.memory_space<smem>>) -> (i32, i32) {
    %c0_i32 = arith.constant 0 : i32
    %c0_i32_0 = arith.constant 0 : i32
    return %arg0, %c0_i32 : i32, i32
  }
  func.func @transform_1(%arg0: i32, %arg1: memref<7xf32, #tpu.memory_space<smem>>) -> (i32, i32) {
    %c0_i32 = arith.constant 0 : i32
    %c0_i32_0 = arith.constant 0 : i32
    return %arg0, %c0_i32 : i32, i32
  }
}

</mosaic_0001>

<llo_original>
// kernel: tpu_custom_call.1
$region0: #{tpu_custom_call.1}
  #allocation0 [shape = 'u32[]', space=smem, size = 0x4, offset = 0x4, fixed_abs, tag = 'smem constant byte address 0x4 - core index']
  #allocation1 [shape = 'u32[144,128]{1,0:T(1,128)}', space=vmem, size = 0x12000, scoped, tag = 'internal scratch']
  #allocation2 [shape = 's32[1]{0}', space=sflag, size = 0x4, scoped, tag = 'scoped memory for tpu_custom_call.1']
  #allocation3 [shape = 'u8[512]{0}', space=smem, size = 0x200, scoped, tag = 'prefetched SMEM operand 0']
  %s0 = inlined_call_operand.hbm [shape: f32[7], index: 0, kind: input, shape index: {}]
  %s1 = inlined_call_operand.hbm [shape: f32[8,256], index: 1, kind: input, shape index: {}]
  %s2 = inlined_call_operand.hbm [shape: f32[8,256], index: 2, kind: output, shape index: {}]
  %s3 = sld [smem:[#allocation0]]
  $region18: #{tpu_custom_call.1} parent=0
    _
  %s5 = ssub.s32 1, %s3
  %s6 = scalar_select 0, %s5, %s3
  %8 = dma.hbm_to_smem %s0, 16, [#allocation3], [#allocation2]
  %9 = dma.done [#allocation2], 16
  %10 = sfence
  $region1: #{tpu_custom_call.1} parent=0
    #allocation4 [shape = 'u8[8192]{0}', space=vmem, size = 0x2000, scoped, tag = 'input window, operand 1, single buffered']
    #allocation5 [shape = 's32[1]{0}', space=sflag, size = 0x4, scoped, tag = 'scoped memory for tpu_custom_call.1']
    #allocation6 [shape = 's32[1]{0}', space=sflag, size = 0x4, scoped, tag = 'scoped memory for tpu_custom_call.1']
    #allocation7 [shape = 'u8[8192]{0}', space=vmem, size = 0x2000, scoped, tag = 'output window, operand 0, single buffered']
    %11 = vsyncpa [#allocation5], 0
    %12 = vsyncpa [#allocation6], 0
    // Predicated region
    $region2: #{tpu_custom_call.1} parent=1 // pred_check
      _
    $region3: #{tpu_custom_call.1} parent=1 // pred_check_branch
      %14 = sbr.rel (0) target = $region5
    $region4: #{tpu_custom_call.1} parent=1 // pred_region
      %s16 = ssub.s32 256, 256
      %17 = vsyncadd [#allocation5], %s16
      %s19 = sshll.u32 [#allocation4], 4
      %s20 = int_to_ptr.vmem [resolvable:$true] %s19
      %22 = dma.hbm_to_vmem [thread:$0]  %s1, 256, %s20, [#allocation5]
    $region5: #{tpu_custom_call.1} parent=1 // pred_fallthru
      _
    // Predicated region
    $region6: #{tpu_custom_call.1} parent=1 // pred_check
      _
    $region7: #{tpu_custom_call.1} parent=1 // pred_check_branch
      %24 = sbr.rel (0) target = $region9
    $region8: #{tpu_custom_call.1} parent=1 // pred_region
      %25 = dma.done [#allocation5], 256
    $region9: #{tpu_custom_call.1} parent=1 // pred_fallthru
      _
    %s26 = sld [smem:[#allocation3]]
    %s27 = sld [smem:[#allocation3 + $0x1]]
    %s28 = sld [smem:[#allocation3 + $0x2]]
    %s29 = sld [smem:[#allocation3 + $0x3]]
    %s30 = sld [smem:[#allocation3 + $0x4]]
    %s31 = sld [smem:[#allocation3 + $0x5]]
    %s32 = sld [smem:[#allocation3 + $0x6]]
    %v33 = vld [vmem:[#allocation4] sm:$0xff]
    %v34 = vld [vmem:[#allocation4 + $0x8] sm:$0xff]
    %v35 = vstv %s26
    %v36 = vmul.f32 %v33, %v35
    %v37 = vmul.f32 %v34, %v35
    %v38 = vstv %s27
    %v39 = vadd.f32 %v36, %v38
    %v40 = vadd.f32 %v37, %v38
    %v41 = vmax.f32 %v39, 0.0
    %v42 = vmax.f32 %v40, 0.0
    %v43 = vstv %s28
    %v44 = vmul.f32 %v41, %v43
    %v45 = vmul.f32 %v42, %v43
    %v46 = vstv %s29
    %v47 = vmul.f32 %v33, %v46
    %v48 = vmul.f32 %v34, %v46
    %v49 = vstv %s30
    %v50 = vadd.f32 %v47, %v49
    %v51 = vadd.f32 %v48, %v49
    %v52 = vmax.f32 %v50, 0.0
    %v53 = vmax.f32 %v51, 0.0
    %v54 = vstv %s31
    %v55 = vmul.f32 %v52, %v54
    %v56 = vmul.f32 %v53, %v54
    %v57 = vadd.f32 %v44, %v55
    %v58 = vadd.f32 %v45, %v56
    %v59 = vstv %s32
    %v60 = vadd.f32 %v57, %v59
    %v61 = vadd.f32 %v58, %v59
    %v62 = vmax.f32 %v60, 0.0
    %v63 = vmax.f32 %v61, 0.0
    %64 = vst [vmem:[#allocation7] sm:$0xff] %v62
    %65 = vst [vmem:[#allocation7 + $0x8] sm:$0xff] %v63
    // Predicated region
    $region10: #{tpu_custom_call.1} parent=1 // pred_check
      _
    $region11: #{tpu_custom_call.1} parent=1 // pred_check_branch
      %67 = sbr.rel (0) target = $region13
    $region12: #{tpu_custom_call.1} parent=1 // pred_region
      %s69 = ssub.s32 256, 256
      %70 = vsyncadd [#allocation6], %s69
      %s72 = sshll.u32 [#allocation7], 4
      %s73 = int_to_ptr.vmem [resolvable:$true] %s72
      %75 = dma.vmem_to_hbm [thread:$0]  %s73, 256, %s2, [#allocation6]
    $region13: #{tpu_custom_call.1} parent=1 // pred_fallthru
      _
    // Predicated region
    $region14: #{tpu_custom_call.1} parent=1 // pred_check
      _
    $region15: #{tpu_custom_call.1} parent=1 // pred_check_branch
      %77 = sbr.rel (0) target = $region17
    $region16: #{tpu_custom_call.1} parent=1 // pred_region
      %78 = dma.done [#allocation6], 256
    $region17: #{tpu_custom_call.1} parent=1 // pred_fallthru
      _
    %79 = vsyncpa [#allocation5], 1
    %80 = vsyncpa [#allocation6], 1

</llo_original>
